<compile_context>
chip_gen: v7x
topology: tpu7x:2x2x1
jax: 0.10.0
libtpu: 0.0.40
codegen_flags: <defaults>
</compile_context>

<pallas_src>
import functools

import jax
import jax.numpy as jnp
from jax.experimental import pallas as pl
from jax.experimental.pallas import tpu as pltpu


def _chomp_kernel(x_ref, o_ref, *, chomp_f):
    # x_ref: (tm, F) tile in VMEM; o_ref: (tm, F - chomp_f) tile in VMEM.
    x = x_ref[...]
    o_ref[...] = x[:, chomp_f:]          # static slice along the lane axis


def _round_up(n, m):
    return ((n + m - 1) // m) * m


def _pick_block_rows(M, F, Fo, itemsize, *, vmem_budget_bytes=24 << 20,
                     max_rows=8192):
    """Pick a row-tile size for the (M, F) -> (M, Fo) copy.

    Targets: big tiles (HBM-bound op), multiple of the sublane pack, bounded
    double-buffered VMEM footprint, tail-free when a divisor of M exists, and
    >= 2 grid steps so a v7x chip can use both TensorCores.
    """
    pack = max(8, 32 // itemsize)                 # 8 for f32, 16 bf16, 32 int8
    per_row_bytes = (F + Fo) * itemsize
    cap = min(max_rows, vmem_budget_bytes // (2 * per_row_bytes))
    cap = max(pack, (cap // pack) * pack)

    if M <= cap:
        if M >= 2 * pack:
            # Split into ~2 tiles so the "parallel" grid axis has work for
            # both TensorCores on v7x (harmless on v5e/v6e).
            return _round_up((M + 1) // 2, pack)
        return M                                  # tiny input: one full block

    # M > cap: prefer the largest tile <= cap that divides M (no masked tail);
    # otherwise just take the cap and accept one partially-masked final block.
    lo = max(pack, cap // 2)
    for t in range(cap, lo - 1, -pack):
        if M % t == 0:
            return t
    return cap


def up_chomp_f(x, chomp_f):
    """Pallas implementation of up_Chomp_F: returns x[:, :, :, chomp_f:]."""
    B, C, T, F = x.shape
    assert 0 <= chomp_f < F
    Fo = F - chomp_f

    M = B * C * T
    x2 = x.reshape(M, F)
    itemsize = jnp.dtype(x.dtype).itemsize

    tm = _pick_block_rows(M, F, Fo, itemsize)
    grid = (pl.cdiv(M, tm),)

    # Double-buffered in+out footprint, plus headroom for Mosaic scratch.
    vmem_needed = 2 * tm * (F + Fo) * itemsize
    vmem_limit = max(int(vmem_needed * 1.25) + (1 << 20), 16 << 20)

    out = pl.pallas_call(
        functools.partial(_chomp_kernel, chomp_f=chomp_f),
        out_shape=jax.ShapeDtypeStruct((M, Fo), x.dtype),
        grid_spec=pltpu.PrefetchScalarGridSpec(
            num_scalar_prefetch=0,
            grid=grid,
            in_specs=[pl.BlockSpec((tm, F), lambda i: (i, 0))],
            out_specs=pl.BlockSpec((tm, Fo), lambda i: (i, 0)),
        ),
        compiler_params=pltpu.CompilerParams(
            dimension_semantics=("parallel",),
            vmem_limit_bytes=vmem_limit,
        ),
        cost_estimate=pl.CostEstimate(
            flops=0,
            transcendentals=0,
            bytes_accessed=(M * F + M * Fo) * itemsize,
        ),
    )(x2)

    return out.reshape(B, C, T, Fo)


if __name__ == "__main__":
    # Small shapes consistent with where up_Chomp_F sits in DARCN's decoder:
    # a ConvTranspose2d output [B, C, T, F] whose leading frequency bin(s) are
    # chomped off.
    B, C, T, F = 2, 16, 16, 161
    chomp_f = 1

    key = jax.random.PRNGKey(0)
    x = jax.random.normal(key, (B, C, T, F), dtype=jnp.float32)

    y = up_chomp_f(x, chomp_f)
    y = jax.block_until_ready(y)

    ref = x[:, :, :, chomp_f:]
    assert y.shape == (B, C, T, F - chomp_f), y.shape
    assert bool(jnp.array_equal(y, ref))
    print("KERNEL_OK")
</pallas_src>

<mosaic_0001>
module attributes {stable_mosaic.version = 11 : i64} {
  func.func @_chomp_kernel(%arg0: i32, %arg1: memref<256x161xf32, #tpu.memory_space<vmem>>, %arg2: memref<256x160xf32, #tpu.memory_space<vmem>>) attributes {dimension_semantics = [#tpu.dimension_semantics<parallel>], iteration_bounds = array<i64: 2>, scalar_prefetch = 0 : i64, scratch_operands = 0 : i64, tpu.core_type = #tpu.core_type<tc>, window_params = [{transform_indices = @transform_0, window_bounds = array<i64: 256, 161>}, {transform_indices = @transform_1, window_bounds = array<i64: 256, 160>}]} {
    %c0 = arith.constant 0 : index
    %c0_0 = arith.constant 0 : index
    %0 = vector.load %arg1[%c0, %c0_0] : memref<256x161xf32, #tpu.memory_space<vmem>>, vector<256x161xf32>
    %1 = vector.extract_strided_slice %0 {offsets = [0, 1], sizes = [256, 160], strides = [1, 1]} : vector<256x161xf32> to vector<256x160xf32>
    %c0_1 = arith.constant 0 : index
    %c0_2 = arith.constant 0 : index
    %2 = vector.load %arg2[%c0_1, %c0_2] : memref<256x160xf32, #tpu.memory_space<vmem>>, vector<256x160xf32>
    tpu.vector_store %arg2[%c0_1, %c0_2], %1 {strides = array<i32>} : memref<256x160xf32, #tpu.memory_space<vmem>>, vector<256x160xf32>,
    return
  }
  func.func @transform_0(%arg0: i32) -> (i32, i32) {
    %c0_i32 = arith.constant 0 : i32
    %c0_i32_0 = arith.constant 0 : i32
    return %arg0, %c0_i32 : i32, i32
  }
  func.func @transform_1(%arg0: i32) -> (i32, i32) {
    %c0_i32 = arith.constant 0 : i32
    %c0_i32_0 = arith.constant 0 : i32
    return %arg0, %c0_i32 : i32, i32
  }
}

</mosaic_0001>

<llo_original>
// kernel: tpu_custom_call.1
$region0: #{tpu_custom_call.1}
  #allocation0 [shape = 'u32[]', space=smem, size = 0x4, offset = 0x4, fixed_abs, tag = 'smem constant byte address 0x4 - core index']
  #allocation1 [shape = 'u32[144,128]{1,0:T(1,128)}', space=vmem, size = 0x12000, scoped, tag = 'internal scratch']
  %s0 = inlined_call_operand.vmem [shape: f32[512,161], index: 0, kind: input, shape index: {}]
  %s1 = inlined_call_operand.vmem [shape: f32[512,160], index: 1, kind: output, shape index: {}]
  %s2 = sld [smem:[#allocation0]]
  $region37: #{tpu_custom_call.1} parent=0
    _
  %s4 = ssub.s32 1, %s2
  %s5 = scalar_select 0, %s4, %s2
  loop: start=0, step=1, limit=4
  $region2: #{tpu_custom_call.1} parent=0 // loop_pre_header
    _
  $region3: #{tpu_custom_call.1} parent=0 // loop_header
    %s7 = sphi 0, %s11
    %p8 = scmp.ge.s32.totalorder %s7, 4
    %s17 = sphi 0, %s19
    %s20 = sphi 0, %s17
    %s21 = sphi 0, %s20
    %s37 = sphi 0, %s21
    %s43 = sphi 0, %s45
    %s46 = sphi 0, %s43
    %s47 = sphi 0, %s46
    %s63 = sphi 0, %s47
  $region4: #{tpu_custom_call.1} parent=0 // loop_header_branch
    %10 = sbr.rel (%p8) target = $region8
  $region5: #{tpu_custom_call.1} parent=0 // loop_body
    %s12 = ssub.s32 %s7, 1
    %s13 = ssub.s32 %s7, 2
    %s14 = sadd.s32 %s7, 1
    %s15 = ssub.s32 %s7, %s14
    %p16 = scmp.eq.s32.totalorder %s15, 0
    %s18 = sadd.s32 %s17, 1
    %s19 = scalar_select %p16, %s17, %s18
    %p22 = pneg %p16
    %p23 = scmp.eq.s32.totalorder %s7, 1
    %p24 = por %p22, %p23
    %p25 = scmp.ne.s32.totalorder %s17, %s20
    %p26 = scmp.eq.s32.totalorder %s7, 0
    %p27 = por %p25, %p26
    %p28 = scmp.ne.s32.totalorder %s17, %s20
    %p29 = scmp.eq.s32.totalorder %s12, 1
    %p30 = por %p28, %p29
    %p31 = scmp.ne.s32.totalorder %s20, %s21
    %p32 = scmp.eq.s32.totalorder %s12, 0
    %p33 = por %p31, %p32
    %p34 = scmp.ne.s32.totalorder %s20, %s21
    %p35 = scmp.eq.s32.totalorder %s13, 1
    %p36 = por %p34, %p35
    %p38 = scmp.ne.s32.totalorder %s21, %s37
    %p39 = scmp.eq.s32.totalorder %s13, 0
    %p40 = por %p38, %p39
    %s41 = ssub.s32 %s7, %s14
    %p42 = scmp.eq.s32.totalorder %s41, 0
    %s44 = sadd.s32 %s43, 1
    %s45 = scalar_select %p42, %s43, %s44
    %p48 = pneg %p42
    %p49 = scmp.eq.s32.totalorder %s7, 1
    %p50 = por %p48, %p49
    %p51 = scmp.ne.s32.totalorder %s43, %s46
    %p52 = scmp.eq.s32.totalorder %s7, 0
    %p53 = por %p51, %p52
    %p54 = scmp.ne.s32.totalorder %s43, %s46
    %p55 = scmp.eq.s32.totalorder %s12, 1
    %p56 = por %p54, %p55
    %p57 = scmp.ne.s32.totalorder %s46, %s47
    %p58 = scmp.eq.s32.totalorder %s12, 0
    %p59 = por %p57, %p58
    %p60 = scmp.ne.s32.totalorder %s46, %s47
    %p61 = scmp.eq.s32.totalorder %s13, 1
    %p62 = por %p60, %p61
    %p64 = scmp.ne.s32.totalorder %s47, %s63
    %p65 = scmp.eq.s32.totalorder %s13, 0
    %p66 = por %p64, %p65
    %p67 = scmp.le.s32.totalorder 1, %s7
    %p68 = scmp.lt.s32.totalorder %s7, 3
    %p69 = pnand %p67, %p68
    %p70 = pneg %p69
    // Predicated region
    $region9: #{tpu_custom_call.1} parent=5 // pred_check
      _
    $region10: #{tpu_custom_call.1} parent=5 // pred_check_branch
      %72 = sbr.rel (%p69) target = $region12
    $region11: #{tpu_custom_call.1} parent=5 // pred_region
      %s73 = ssub.s32 %s7, 1
    $region12: #{tpu_custom_call.1} parent=5 // pred_fallthru
      _
    %p74 = scmp.lt.s32.totalorder %s7, 2
    // Predicated region
    $region13: #{tpu_custom_call.1} parent=5 // pred_check
      %p75 = pneg %p74
    $region14: #{tpu_custom_call.1} parent=5 // pred_check_branch
      %77 = sbr.rel (%p75) target = $region16
    $region15: #{tpu_custom_call.1} parent=5 // pred_region
      // Predicated region
      $region17: #{tpu_custom_call.1} parent=15 // pred_check
        %p78 = pneg %p27
      $region18: #{tpu_custom_call.1} parent=15 // pred_check_branch
        %80 = sbr.rel (%p78) target = $region20
      $region19: #{tpu_custom_call.1} parent=15 // pred_region
        %s81 = smul.u32 32, %s7
        %p82 = scmp.lt.s32.totalorder %s81, 63
        %s83 = scalar_select %p82, %s81, 63
        %s84 = smul.addr %s83, 2
        %s85 = smul.addr %s84, 8
        %s86 = scalar_lea.vmem %s0, %s85
        %s87 = smul.u32 32, %s7
      $region20: #{tpu_custom_call.1} parent=15 // pred_fallthru
        _
    $region16: #{tpu_custom_call.1} parent=5 // pred_fallthru
      _
    %p88 = scmp.le.s32.totalorder 1, %s7
    %p89 = scmp.lt.s32.totalorder %s7, 3
    %p90 = pnand %p88, %p89
    %p91 = pneg %p90
    // Predicated region
    $region21: #{tpu_custom_call.1} parent=5 // pred_check
      _
    $region22: #{tpu_custom_call.1} parent=5 // pred_check_branch
      %93 = sbr.rel (%p90) target = $region24
    $region23: #{tpu_custom_call.1} parent=5 // pred_region
      %s94 = ssub.s32 %s7, 1
      %s95 = smul.u32 32, %s12
      %p96 = scmp.lt.s32.totalorder %s95, 63
      %s97 = scalar_select %p96, %s95, 63
      %s98 = smul.addr %s97, 2
      %s99 = smul.addr %s98, 8
      %s100 = scalar_lea.vmem %s0, %s99
      %p101 = pneg %p33
      %p102 = pneg %p30
      %p103 = pneg %p59
      %p104 = pneg %p56
      %s105 = smul.u32 32, %s12
      %p106 = scmp.lt.s32.totalorder %s105, 63
      %s107 = scalar_select %p106, %s105, 63
      %s108 = smul.addr %s107, 2
      %s109 = smul.addr %s108, 8
      %s110 = scalar_lea.vmem %s1, %s109
      %s111 = smul.u32 32, %s12
      %p112 = scmp.lt.s32.totalorder %s111, 63
      %s113 = scalar_select %p112, %s111, 63
      %s114 = smul.addr %s113, 2
      %s115 = smul.addr %s114, 8
      %s116 = scalar_lea.vmem %s0, %s115
      %s117 = smul.u32 32, %s12
      %s118 = smul.u32 32, %s12
      %p119 = scmp.lt.s32.totalorder %s118, 63
      %s120 = scalar_select %p119, %s118, 63
      %s121 = smul.addr %s120, 2
      %s122 = smul.addr %s121, 8
      %s123 = scalar_lea.vmem %s1, %s122
      %s124 = smul.u32 32, %s12
      %v125 = vld [vmem:[%s116] sm:$0xff]
      %v126 = vld [vmem:[%s116 + $0x8] sm:$0xff]
      %v127 = vld [vmem:[%s116 + $0x10] sm:$0xff]
      %v128 = vld [vmem:[%s116 + $0x18] sm:$0xff]
      %v129 = vld [vmem:[%s116 + $0x20] sm:$0xff]
      %v130 = vld [vmem:[%s116 + $0x28] sm:$0xff]
      %v131 = vld [vmem:[%s116 + $0x30] sm:$0xff]
      %v132 = vld [vmem:[%s116 + $0x38] sm:$0xff]
      %v133 = vld [vmem:[%s116 + $0x40] sm:$0xff]
      %v134 = vld [vmem:[%s116 + $0x48] sm:$0xff]
      %v135 = vld [vmem:[%s116 + $0x50] sm:$0xff]
      %v136 = vld [vmem:[%s116 + $0x58] sm:$0xff]
      %v137 = vld [vmem:[%s116 + $0x60] sm:$0xff]
      %v138 = vld [vmem:[%s116 + $0x68] sm:$0xff]
      %v139 = vld [vmem:[%s116 + $0x70] sm:$0xff]
      %v140 = vld [vmem:[%s116 + $0x78] sm:$0xff]
      %v141 = vld [vmem:[%s116 + $0x80] sm:$0xff]
      %v142 = vld [vmem:[%s116 + $0x88] sm:$0xff]
      %v143 = vld [vmem:[%s116 + $0x90] sm:$0xff]
      %v144 = vld [vmem:[%s116 + $0x98] sm:$0xff]
      %v145 = vld [vmem:[%s116 + $0xa0] sm:$0xff]
      %v146 = vld [vmem:[%s116 + $0xa8] sm:$0xff]
      %v147 = vld [vmem:[%s116 + $0xb0] sm:$0xff]
      %v148 = vld [vmem:[%s116 + $0xb8] sm:$0xff]
      %v149 = vld [vmem:[%s116 + $0xc0] sm:$0xff]
      %v150 = vld [vmem:[%s116 + $0xc8] sm:$0xff]
      %v151 = vld [vmem:[%s116 + $0xd0] sm:$0xff]
      %v152 = vld [vmem:[%s116 + $0xd8] sm:$0xff]
      %v153 = vld [vmem:[%s116 + $0xe0] sm:$0xff]
      %v154 = vld [vmem:[%s116 + $0xe8] sm:$0xff]
      %v155 = vld [vmem:[%s116 + $0xf0] sm:$0xff]
      %v156 = vld [vmem:[%s116 + $0xf8] sm:$0xff]
      %v157 = vld [vmem:[%s116 + $0x100] sm:$0xff]
      %v158 = vld [vmem:[%s116 + $0x108] sm:$0xff]
      %v159 = vld [vmem:[%s116 + $0x110] sm:$0xff]
      %v160 = vld [vmem:[%s116 + $0x118] sm:$0xff]
      %v161 = vld [vmem:[%s116 + $0x120] sm:$0xff]
      %v162 = vld [vmem:[%s116 + $0x128] sm:$0xff]
      %v163 = vld [vmem:[%s116 + $0x130] sm:$0xff]
      %v164 = vld [vmem:[%s116 + $0x138] sm:$0xff]
      %v165 = vld [vmem:[%s116 + $0x140] sm:$0xff]
      %v166 = vld [vmem:[%s116 + $0x148] sm:$0xff]
      %v167 = vld [vmem:[%s116 + $0x150] sm:$0xff]
      %v168 = vld [vmem:[%s116 + $0x158] sm:$0xff]
      %v169 = vld [vmem:[%s116 + $0x160] sm:$0xff]
      %v170 = vld [vmem:[%s116 + $0x168] sm:$0xff]
      %v171 = vld [vmem:[%s116 + $0x170] sm:$0xff]
      %v172 = vld [vmem:[%s116 + $0x178] sm:$0xff]
      %v173 = vld [vmem:[%s116 + $0x180] sm:$0xff]
      %v174 = vld [vmem:[%s116 + $0x188] sm:$0xff]
      %v175 = vld [vmem:[%s116 + $0x190] sm:$0xff]
      %v176 = vld [vmem:[%s116 + $0x198] sm:$0xff]
      %v177 = vld [vmem:[%s116 + $0x1a0] sm:$0xff]
      %v178 = vld [vmem:[%s116 + $0x1a8] sm:$0xff]
      %v179 = vld [vmem:[%s116 + $0x1b0] sm:$0xff]
      %v180 = vld [vmem:[%s116 + $0x1b8] sm:$0xff]
      %v181 = vld [vmem:[%s116 + $0x1c0] sm:$0xff]
      %v182 = vld [vmem:[%s116 + $0x1c8] sm:$0xff]
      %v183 = vld [vmem:[%s116 + $0x1d0] sm:$0xff]
      %v184 = vld [vmem:[%s116 + $0x1d8] sm:$0xff]
      %v185 = vld [vmem:[%s116 + $0x1e0] sm:$0xff]
      %v186 = vld [vmem:[%s116 + $0x1e8] sm:$0xff]
      %v187 = vld [vmem:[%s116 + $0x1f0] sm:$0xff]
      %v188 = vld [vmem:[%s116 + $0x1f8] sm:$0xff]
      %253 = vrot.lane.b32.xlu0 %v125, 127
      %v254 = vpop.permute.xlu0 %253
      %255 = vrot.lane.b32.xlu0 %v126, 127
      %v256 = vpop.permute.xlu0 %255
      %257 = vrot.lane.b32.xlu0 %v127, 127
      %v258 = vpop.permute.xlu0 %257
      %259 = vrot.lane.b32.xlu0 %v128, 127
      %v260 = vpop.permute.xlu0 %259
      %261 = vrot.lane.b32.xlu0 %v129, 127
      %v262 = vpop.permute.xlu0 %261
      %263 = vrot.lane.b32.xlu0 %v130, 127
      %v264 = vpop.permute.xlu0 %263
      %265 = vrot.lane.b32.xlu0 %v131, 127
      %v266 = vpop.permute.xlu0 %265
      %267 = vrot.lane.b32.xlu0 %v132, 127
      %v268 = vpop.permute.xlu0 %267
      %269 = vrot.lane.b32.xlu0 %v133, 127
      %v270 = vpop.permute.xlu0 %269
      %271 = vrot.lane.b32.xlu0 %v134, 127
      %v272 = vpop.permute.xlu0 %271
      %273 = vrot.lane.b32.xlu0 %v135, 127
      %v274 = vpop.permute.xlu0 %273
      %275 = vrot.lane.b32.xlu0 %v136, 127
      %v276 = vpop.permute.xlu0 %275
      %277 = vrot.lane.b32.xlu0 %v137, 127
      %v278 = vpop.permute.xlu0 %277
      %279 = vrot.lane.b32.xlu0 %v138, 127
      %v280 = vpop.permute.xlu0 %279
      %281 = vrot.lane.b32.xlu0 %v139, 127
      %v282 = vpop.permute.xlu0 %281
      %283 = vrot.lane.b32.xlu0 %v140, 127
      %v284 = vpop.permute.xlu0 %283
      %285 = vrot.lane.b32.xlu0 %v141, 127
      %v286 = vpop.permute.xlu0 %285
      %287 = vrot.lane.b32.xlu0 %v142, 127
      %v288 = vpop.permute.xlu0 %287
      %289 = vrot.lane.b32.xlu0 %v143, 127
      %v290 = vpop.permute.xlu0 %289
      %291 = vrot.lane.b32.xlu0 %v144, 127
      %v292 = vpop.permute.xlu0 %291
      %293 = vrot.lane.b32.xlu0 %v145, 127
      %v294 = vpop.permute.xlu0 %293
      %295 = vrot.lane.b32.xlu0 %v146, 127
      %v296 = vpop.permute.xlu0 %295
      %297 = vrot.lane.b32.xlu0 %v147, 127
      %v298 = vpop.permute.xlu0 %297
      %299 = vrot.lane.b32.xlu0 %v148, 127
      %v300 = vpop.permute.xlu0 %299
      %301 = vrot.lane.b32.xlu0 %v149, 127
      %v302 = vpop.permute.xlu0 %301
      %303 = vrot.lane.b32.xlu0 %v150, 127
      %v304 = vpop.permute.xlu0 %303
      %305 = vrot.lane.b32.xlu0 %v151, 127
      %v306 = vpop.permute.xlu0 %305
      %307 = vrot.lane.b32.xlu0 %v152, 127
      %v308 = vpop.permute.xlu0 %307
      %309 = vrot.lane.b32.xlu0 %v153, 127
      %v310 = vpop.permute.xlu0 %309
      %311 = vrot.lane.b32.xlu0 %v154, 127
      %v312 = vpop.permute.xlu0 %311
      %313 = vrot.lane.b32.xlu0 %v155, 127
      %v314 = vpop.permute.xlu0 %313
      %315 = vrot.lane.b32.xlu0 %v156, 127
      %v316 = vpop.permute.xlu0 %315
      %317 = vrot.lane.b32.xlu0 %v157, 127
      %v318 = vpop.permute.xlu0 %317
      %319 = vrot.lane.b32.xlu0 %v158, 127
      %v320 = vpop.permute.xlu0 %319
      %321 = vrot.lane.b32.xlu0 %v159, 127
      %v322 = vpop.permute.xlu0 %321
      %323 = vrot.lane.b32.xlu0 %v160, 127
      %v324 = vpop.permute.xlu0 %323
      %325 = vrot.lane.b32.xlu0 %v161, 127
      %v326 = vpop.permute.xlu0 %325
      %327 = vrot.lane.b32.xlu0 %v162, 127
      %v328 = vpop.permute.xlu0 %327
      %329 = vrot.lane.b32.xlu0 %v163, 127
      %v330 = vpop.permute.xlu0 %329
      %331 = vrot.lane.b32.xlu0 %v164, 127
      %v332 = vpop.permute.xlu0 %331
      %333 = vrot.lane.b32.xlu0 %v165, 127
      %v334 = vpop.permute.xlu0 %333
      %335 = vrot.lane.b32.xlu0 %v166, 127
      %v336 = vpop.permute.xlu0 %335
      %337 = vrot.lane.b32.xlu0 %v167, 127
      %v338 = vpop.permute.xlu0 %337
      %339 = vrot.lane.b32.xlu0 %v168, 127
      %v340 = vpop.permute.xlu0 %339
      %341 = vrot.lane.b32.xlu0 %v169, 127
      %v342 = vpop.permute.xlu0 %341
      %343 = vrot.lane.b32.xlu0 %v170, 127
      %v344 = vpop.permute.xlu0 %343
      %345 = vrot.lane.b32.xlu0 %v171, 127
      %v346 = vpop.permute.xlu0 %345
      %347 = vrot.lane.b32.xlu0 %v172, 127
      %v348 = vpop.permute.xlu0 %347
      %349 = vrot.lane.b32.xlu0 %v173, 127
      %v350 = vpop.permute.xlu0 %349
      %351 = vrot.lane.b32.xlu0 %v174, 127
      %v352 = vpop.permute.xlu0 %351
      %353 = vrot.lane.b32.xlu0 %v175, 127
      %v354 = vpop.permute.xlu0 %353
      %355 = vrot.lane.b32.xlu0 %v176, 127
      %v356 = vpop.permute.xlu0 %355
      %357 = vrot.lane.b32.xlu0 %v177, 127
      %v358 = vpop.permute.xlu0 %357
      %359 = vrot.lane.b32.xlu0 %v178, 127
      %v360 = vpop.permute.xlu0 %359
      %361 = vrot.lane.b32.xlu0 %v179, 127
      %v362 = vpop.permute.xlu0 %361
      %363 = vrot.lane.b32.xlu0 %v180, 127
      %v364 = vpop.permute.xlu0 %363
      %365 = vrot.lane.b32.xlu0 %v181, 127
      %v366 = vpop.permute.xlu0 %365
      %367 = vrot.lane.b32.xlu0 %v182, 127
      %v368 = vpop.permute.xlu0 %367
      %369 = vrot.lane.b32.xlu0 %v183, 127
      %v370 = vpop.permute.xlu0 %369
      %371 = vrot.lane.b32.xlu0 %v184, 127
      %v372 = vpop.permute.xlu0 %371
      %373 = vrot.lane.b32.xlu0 %v185, 127
      %v374 = vpop.permute.xlu0 %373
      %375 = vrot.lane.b32.xlu0 %v186, 127
      %v376 = vpop.permute.xlu0 %375
      %377 = vrot.lane.b32.xlu0 %v187, 127
      %v378 = vpop.permute.xlu0 %377
      %379 = vrot.lane.b32.xlu0 %v188, 127
      %v380 = vpop.permute.xlu0 %379
      %vm381 = vcmask 1039360
      %v382 = vsel %vm381, %v254, %v256
      %v383 = vsel %vm381, %v258, %v260
      %v384 = vsel %vm381, %v262, %v264
      %v385 = vsel %vm381, %v266, %v268
      %v386 = vsel %vm381, %v270, %v272
      %v387 = vsel %vm381, %v274, %v276
      %v388 = vsel %vm381, %v278, %v280
      %v389 = vsel %vm381, %v282, %v284
      %v390 = vsel %vm381, %v286, %v288
      %v391 = vsel %vm381, %v290, %v292
      %v392 = vsel %vm381, %v294, %v296
      %v393 = vsel %vm381, %v298, %v300
      %v394 = vsel %vm381, %v302, %v304
      %v395 = vsel %vm381, %v306, %v308
      %v396 = vsel %vm381, %v310, %v312
      %v397 = vsel %vm381, %v314, %v316
      %v398 = vsel %vm381, %v318, %v320
      %v399 = vsel %vm381, %v322, %v324
      %v400 = vsel %vm381, %v326, %v328
      %v401 = vsel %vm381, %v330, %v332
      %v402 = vsel %vm381, %v334, %v336
      %v403 = vsel %vm381, %v338, %v340
      %v404 = vsel %vm381, %v342, %v344
      %v405 = vsel %vm381, %v346, %v348
      %v406 = vsel %vm381, %v350, %v352
      %v407 = vsel %vm381, %v354, %v356
      %v408 = vsel %vm381, %v358, %v360
      %v409 = vsel %vm381, %v362, %v364
      %v410 = vsel %vm381, %v366, %v368
      %v411 = vsel %vm381, %v370, %v372
      %v412 = vsel %vm381, %v374, %v376
      %v413 = vsel %vm381, %v378, %v380
      %478 = vst [vmem:[%s123] sm:$0xff] %v382
      %vm479 = vcmask 261120
      %480 = vst.msk [vmem:[%s123 + $0x8] sm:$0xff] %vm479, %v256
      %481 = vst [vmem:[%s123 + $0x10] sm:$0xff] %v383
      %482 = vst.msk [vmem:[%s123 + $0x18] sm:$0xff] %vm479, %v260
      %483 = vst [vmem:[%s123 + $0x20] sm:$0xff] %v384
      %484 = vst.msk [vmem:[%s123 + $0x28] sm:$0xff] %vm479, %v264
      %485 = vst [vmem:[%s123 + $0x30] sm:$0xff] %v385
      %486 = vst.msk [vmem:[%s123 + $0x38] sm:$0xff] %vm479, %v268
      %487 = vst [vmem:[%s123 + $0x40] sm:$0xff] %v386
      %488 = vst.msk [vmem:[%s123 + $0x48] sm:$0xff] %vm479, %v272
      %489 = vst [vmem:[%s123 + $0x50] sm:$0xff] %v387
      %490 = vst.msk [vmem:[%s123 + $0x58] sm:$0xff] %vm479, %v276
      %491 = vst [vmem:[%s123 + $0x60] sm:$0xff] %v388
      %492 = vst.msk [vmem:[%s123 + $0x68] sm:$0xff] %vm479, %v280
      %493 = vst [vmem:[%s123 + $0x70] sm:$0xff] %v389
      %494 = vst.msk [vmem:[%s123 + $0x78] sm:$0xff] %vm479, %v284
      %495 = vst [vmem:[%s123 + $0x80] sm:$0xff] %v390
      %496 = vst.msk [vmem:[%s123 + $0x88] sm:$0xff] %vm479, %v288
      %497 = vst [vmem:[%s123 + $0x90] sm:$0xff] %v391
      %498 = vst.msk [vmem:[%s123 + $0x98] sm:$0xff] %vm479, %v292
      %499 = vst [vmem:[%s123 + $0xa0] sm:$0xff] %v392
      %500 = vst.msk [vmem:[%s123 + $0xa8] sm:$0xff] %vm479, %v296
      %501 = vst [vmem:[%s123 + $0xb0] sm:$0xff] %v393
      %502 = vst.msk [vmem:[%s123 + $0xb8] sm:$0xff] %vm479, %v300
      %503 = vst [vmem:[%s123 + $0xc0] sm:$0xff] %v394
      %504 = vst.msk [vmem:[%s123 + $0xc8] sm:$0xff] %vm479, %v304
      %505 = vst [vmem:[%s123 + $0xd0] sm:$0xff] %v395
      %506 = vst.msk [vmem:[%s123 + $0xd8] sm:$0xff] %vm479, %v308
      %507 = vst [vmem:[%s123 + $0xe0] sm:$0xff] %v396
      %508 = vst.msk [vmem:[%s123 + $0xe8] sm:$0xff] %vm479, %v312
      %509 = vst [vmem:[%s123 + $0xf0] sm:$0xff] %v397
      %510 = vst.msk [vmem:[%s123 + $0xf8] sm:$0xff] %vm479, %v316
      %511 = vst [vmem:[%s123 + $0x100] sm:$0xff] %v398
      %512 = vst.msk [vmem:[%s123 + $0x108] sm:$0xff] %vm479, %v320
      %513 = vst [vmem:[%s123 + $0x110] sm:$0xff] %v399
      %514 = vst.msk [vmem:[%s123 + $0x118] sm:$0xff] %vm479, %v324
      %515 = vst [vmem:[%s123 + $0x120] sm:$0xff] %v400
      %516 = vst.msk [vmem:[%s123 + $0x128] sm:$0xff] %vm479, %v328
      %517 = vst [vmem:[%s123 + $0x130] sm:$0xff] %v401
      %518 = vst.msk [vmem:[%s123 + $0x138] sm:$0xff] %vm479, %v332
      %519 = vst [vmem:[%s123 + $0x140] sm:$0xff] %v402
      %520 = vst.msk [vmem:[%s123 + $0x148] sm:$0xff] %vm479, %v336
      %521 = vst [vmem:[%s123 + $0x150] sm:$0xff] %v403
      %522 = vst.msk [vmem:[%s123 + $0x158] sm:$0xff] %vm479, %v340
      %523 = vst [vmem:[%s123 + $0x160] sm:$0xff] %v404
      %524 = vst.msk [vmem:[%s123 + $0x168] sm:$0xff] %vm479, %v344
      %525 = vst [vmem:[%s123 + $0x170] sm:$0xff] %v405
      %526 = vst.msk [vmem:[%s123 + $0x178] sm:$0xff] %vm479, %v348
      %527 = vst [vmem:[%s123 + $0x180] sm:$0xff] %v406
      %528 = vst.msk [vmem:[%s123 + $0x188] sm:$0xff] %vm479, %v352
      %529 = vst [vmem:[%s123 + $0x190] sm:$0xff] %v407
      %530 = vst.msk [vmem:[%s123 + $0x198] sm:$0xff] %vm479, %v356
      %531 = vst [vmem:[%s123 + $0x1a0] sm:$0xff] %v408
      %532 = vst.msk [vmem:[%s123 + $0x1a8] sm:$0xff] %vm479, %v360
      %533 = vst [vmem:[%s123 + $0x1b0] sm:$0xff] %v409
      %534 = vst.msk [vmem:[%s123 + $0x1b8] sm:$0xff] %vm479, %v364
      %535 = vst [vmem:[%s123 + $0x1c0] sm:$0xff] %v410
      %536 = vst.msk [vmem:[%s123 + $0x1c8] sm:$0xff] %vm479, %v368
      %537 = vst [vmem:[%s123 + $0x1d0] sm:$0xff] %v411
      %538 = vst.msk [vmem:[%s123 + $0x1d8] sm:$0xff] %vm479, %v372
      %539 = vst [vmem:[%s123 + $0x1e0] sm:$0xff] %v412
      %540 = vst.msk [vmem:[%s123 + $0x1e8] sm:$0xff] %vm479, %v376
      %541 = vst [vmem:[%s123 + $0x1f0] sm:$0xff] %v413
      %542 = vst.msk [vmem:[%s123 + $0x1f8] sm:$0xff] %vm479, %v380
      %s543 = smul.u32 32, %s12
      %p544 = scmp.lt.s32.totalorder %s543, 63
      %s545 = scalar_select %p544, %s543, 63
      %s546 = smul.addr %s545, 2
      %s547 = smul.addr %s546, 8
      %s548 = scalar_lea.vmem %s1, %s547
      // Predicated region
      $region25: #{tpu_custom_call.1} parent=23 // pred_check
        %p549 = pneg %p56
      $region26: #{tpu_custom_call.1} parent=23 // pred_check_branch
        %551 = sbr.rel (%p549) target = $region28
      $region27: #{tpu_custom_call.1} parent=23 // pred_region
        %s552 = smul.u32 32, %s12
      $region28: #{tpu_custom_call.1} parent=23 // pred_fallthru
        _
    $region24: #{tpu_custom_call.1} parent=5 // pred_fallthru
      _
    %p553 = scmp.le.s32.totalorder 2, %s7
    // Predicated region
    $region29: #{tpu_custom_call.1} parent=5 // pred_check
      %p554 = pneg %p553
    $region30: #{tpu_custom_call.1} parent=5 // pred_check_branch
      %556 = sbr.rel (%p554) target = $region32
    $region31: #{tpu_custom_call.1} parent=5 // pred_region
      %s557 = ssub.s32 %s7, 2
      // Predicated region
      $region33: #{tpu_custom_call.1} parent=31 // pred_check
        %p558 = pneg %p62
      $region34: #{tpu_custom_call.1} parent=31 // pred_check_branch
        %560 = sbr.rel (%p558) target = $region36
      $region35: #{tpu_custom_call.1} parent=31 // pred_region
        %s561 = smul.u32 32, %s13
        %p562 = scmp.lt.s32.totalorder %s561, 63
        %s563 = scalar_select %p562, %s561, 63
        %s564 = smul.addr %s563, 2
        %s565 = smul.addr %s564, 8
        %s566 = scalar_lea.vmem %s1, %s565
      $region36: #{tpu_custom_call.1} parent=31 // pred_fallthru
        _
    $region32: #{tpu_custom_call.1} parent=5 // pred_fallthru
      _
  $region6: #{tpu_custom_call.1} parent=0 // loop_footer
    %s11 = sadd.s32 1, %s7
  $region7: #{tpu_custom_call.1} parent=0 // loop_footer_branch
    %6 = sbr.rel target = $region3
  $region8: #{tpu_custom_call.1} parent=0 // loop_exit
    _

</llo_original>
